<compile_context>
chip_gen: v7x
topology: tpu7x:2x2x1
jax: 0.10.0
libtpu: 0.0.40
codegen_flags: <defaults>
</compile_context>

<pallas_src>
import jax
import jax.numpy as jnp
from jax.experimental import pallas as pl
from jax.experimental.pallas import tpu as pltpu


def conv_bn_relu6_kernel(p_ref, w_ref, shift_ref, o_ref):
    """One M-tile (TM rows of the im2col matrix) per grid step.

    p_ref    : (TM, K)         im2col patches, bf16
    w_ref    : (K, Cout_pad)   BN-scale-folded weights, bf16
    shift_ref: (1, Cout_pad)   folded BN shift, f32
    o_ref    : (TM, Cout_pad)  lane-dense output tile
    """
    # Single fat MXU matmul, f32 accumulation held in vregs (no VMEM scratch).
    acc = jnp.dot(p_ref[...], w_ref[...], preferred_element_type=jnp.float32)
    y = acc + shift_ref[...]          # folded BatchNorm shift (sublane bcast)
    y = jnp.clip(y, 0.0, 6.0)         # ReLU6
    o_ref[...] = y.astype(o_ref.dtype)


def conv2d_bn_relu6(x_nchw, weight_oihw, bn_scale, bn_shift, kernel_size,
                    *, tile_m=512):
    N, Cin, H, W = x_nchw.shape
    Cout = weight_oihw.shape[0]
    KH = KW = kernel_size
    p = kernel_size // 2
    Hp, Wp = H + 2 * p, W + 2 * p
    Ho, Wo = Hp - KH + 1, Wp - KW + 1          # == H, W for odd kernel_size

    # ---- glue in plain JAX: layout, padding, im2col, BN folding ----
    x_nhwc = jnp.transpose(x_nchw, (0, 2, 3, 1))
    xp = jnp.pad(x_nhwc, ((0, 0), (p, p), (p, p), (0, 0)))
    # im2col; feature ordering (kh, kw, cin) matches the weight reshape below.
    patches = jnp.concatenate(
        [xp[:, kh:kh + Ho, kw:kw + Wo, :]
         for kh in range(KH) for kw in range(KW)],
        axis=-1)                                   # (N, Ho, Wo, KH*KW*Cin)
    K = KH * KW * Cin
    M = N * Ho * Wo
    patches = patches.reshape(M, K)

    # Weights OIHW -> (KH,KW,Cin,Cout) -> (K, Cout); fold BN scale per channel.
    w2d = jnp.transpose(weight_oihw, (2, 3, 1, 0)).reshape(K, Cout)
    w2d = w2d * bn_scale.reshape(1, Cout)

    # Lane-dense padding of Cout and row-tile padding of M.
    cout_pad = 128 * pl.cdiv(Cout, 128)
    tm = min(tile_m, 8 * pl.cdiv(M, 8))
    m_pad = tm * pl.cdiv(M, tm)
    patches = jnp.pad(patches, ((0, m_pad - M), (0, 0)))
    w2d = jnp.pad(w2d, ((0, 0), (0, cout_pad - Cout)))
    shift = jnp.pad(bn_shift.astype(jnp.float32),
                    (0, cout_pad - Cout)).reshape(1, cout_pad)

    # bf16 operands (MXU-native); accumulation stays f32 in-kernel.
    patches = patches.astype(jnp.bfloat16)
    w2d = w2d.astype(jnp.bfloat16)

    cost = pl.CostEstimate(
        flops=2 * m_pad * K * cout_pad,
        transcendentals=0,
        bytes_accessed=(patches.size * 2 + w2d.size * 2 + shift.size * 4
                        + m_pad * cout_pad * jnp.dtype(x_nchw.dtype).itemsize),
    )

    out2d = pl.pallas_call(
        conv_bn_relu6_kernel,
        out_shape=jax.ShapeDtypeStruct((m_pad, cout_pad), x_nchw.dtype),
        grid_spec=pltpu.PrefetchScalarGridSpec(
            num_scalar_prefetch=0,
            grid=(m_pad // tm,),
            in_specs=[
                pl.BlockSpec((tm, K), lambda i: (i, 0)),
                pl.BlockSpec((K, cout_pad), lambda i: (0, 0)),
                pl.BlockSpec((1, cout_pad), lambda i: (0, 0)),
            ],
            out_specs=pl.BlockSpec((tm, cout_pad), lambda i: (i, 0)),
        ),
        compiler_params=pltpu.CompilerParams(
            dimension_semantics=("parallel",)),
        cost_estimate=cost,
    )(patches, w2d, shift)

    out = out2d[:M, :Cout].reshape(N, Ho, Wo, Cout)
    return jnp.transpose(out, (0, 3, 1, 2))        # back to NCHW


if __name__ == "__main__":
    # Module config: Conv2d(in_cha=4, out_cha=8, kernel_size=3) with defaults
    # (stride=1, dilation=1, use_bn=True, use_bias=False, activation='relu6').
    N, Cin, H, W = 2, 4, 16, 16
    Cout, Ksz = 8, 3
    eps = 1e-5

    key = jax.random.PRNGKey(0)
    kx, kw, kg, kb, km, kv = jax.random.split(key, 6)

    x = jax.random.normal(kx, (N, Cin, H, W), dtype=jnp.float32)

    # Deterministic parameter init (kaiming-uniform-like for conv weight).
    fan_in = Cin * Ksz * Ksz
    bound = 1.0 / jnp.sqrt(jnp.float32(fan_in))
    weight = jax.random.uniform(kw, (Cout, Cin, Ksz, Ksz),
                                minval=-bound, maxval=bound, dtype=jnp.float32)

    # BatchNorm2d parameters / running stats (deterministic, non-trivial).
    gamma = 1.0 + 0.1 * jax.random.normal(kg, (Cout,), dtype=jnp.float32)
    beta = 0.1 * jax.random.normal(kb, (Cout,), dtype=jnp.float32)
    running_mean = 0.05 * jax.random.normal(km, (Cout,), dtype=jnp.float32)
    running_var = jax.random.uniform(kv, (Cout,), minval=0.5, maxval=1.5,
                                     dtype=jnp.float32)

    bn_scale = gamma / jnp.sqrt(running_var + eps)
    bn_shift = beta - running_mean * bn_scale

    out = conv2d_bn_relu6(x, weight, bn_scale, bn_shift, kernel_size=Ksz)
    out = jax.block_until_ready(out)
    assert out.shape == (N, Cout, H, W), out.shape

    # Cross-check against XLA conv with matching numerics (bf16 operands,
    # BN scale folded into weights, f32 accumulation, shift + ReLU6).
    pad = Ksz // 2
    w_scaled = weight * bn_scale.reshape(-1, 1, 1, 1)
    ref = jax.lax.conv_general_dilated(
        x.astype(jnp.bfloat16), w_scaled.astype(jnp.bfloat16),
        window_strides=(1, 1), padding=((pad, pad), (pad, pad)),
        dimension_numbers=("NCHW", "OIHW", "NCHW"),
        preferred_element_type=jnp.float32)
    ref = ref + bn_shift.reshape(1, -1, 1, 1)
    ref = jnp.clip(ref, 0.0, 6.0).astype(x.dtype)

    assert jnp.allclose(out, ref, rtol=2e-2, atol=2e-2), \
        float(jnp.max(jnp.abs(out - ref)))

    print("KERNEL_OK")
</pallas_src>

<mosaic_0001>
module attributes {stable_mosaic.version = 11 : i64} {
  func.func @conv_bn_relu6_kernel(%arg0: i32, %arg1: memref<512x36xbf16, #tpu.memory_space<vmem>>, %arg2: memref<36x128xbf16, #tpu.memory_space<vmem>>, %arg3: memref<1x128xf32, #tpu.memory_space<vmem>>, %arg4: memref<512x128xf32, #tpu.memory_space<vmem>>) attributes {dimension_semantics = [#tpu.dimension_semantics<parallel>], iteration_bounds = array<i64: 1>, scalar_prefetch = 0 : i64, scratch_operands = 0 : i64, tpu.core_type = #tpu.core_type<tc>, window_params = [{transform_indices = @transform_0, window_bounds = array<i64: 512, 36>}, {pipeline_mode = #tpu.pipeline_mode<synchronous>, transform_indices = @transform_1, window_bounds = array<i64: 36, 128>}, {pipeline_mode = #tpu.pipeline_mode<synchronous>, transform_indices = @transform_2, window_bounds = array<i64: 1, 128>}, {transform_indices = @transform_3, window_bounds = array<i64: 512, 128>}]} {
    %c0 = arith.constant 0 : index
    %c0_0 = arith.constant 0 : index
    %0 = vector.load %arg1[%c0, %c0_0] : memref<512x36xbf16, #tpu.memory_space<vmem>>, vector<512x36xbf16>
    %c0_1 = arith.constant 0 : index
    %c0_2 = arith.constant 0 : index
    %1 = vector.load %arg2[%c0_1, %c0_2] : memref<36x128xbf16, #tpu.memory_space<vmem>>, vector<36x128xbf16>
    %cst = arith.constant dense<0.000000e+00> : vector<512x128xf32>
    %2 = tpu.matmul %0, %1, %cst {dimension_numbers = #tpu.dot_dimension_numbers<[1], [0], [0], [1], [0, 0, 1, 1], [], []>} : vector<512x36xbf16>, vector<36x128xbf16>, vector<512x128xf32> -> vector<512x128xf32>
    %c0_3 = arith.constant 0 : index
    %c0_4 = arith.constant 0 : index
    %3 = vector.load %arg3[%c0_3, %c0_4] : memref<1x128xf32, #tpu.memory_space<vmem>>, vector<1x128xf32>
    %4 = vector.broadcast %3 : vector<1x128xf32> to vector<512x128xf32>
    %5 = arith.addf %2, %4 : vector<512x128xf32>
    %cst_5 = arith.constant 0.000000e+00 : f32
    %cst_6 = arith.constant 6.000000e+00 : f32
    %6 = vector.broadcast %cst_5 : f32 to vector<512x128xf32>
    %7 = arith.maximumf %6, %5 : vector<512x128xf32>
    %8 = vector.broadcast %cst_6 : f32 to vector<512x128xf32>
    %9 = arith.minimumf %8, %7 : vector<512x128xf32>
    %c0_7 = arith.constant 0 : index
    %c0_8 = arith.constant 0 : index
    %10 = vector.load %arg4[%c0_7, %c0_8] : memref<512x128xf32, #tpu.memory_space<vmem>>, vector<512x128xf32>
    tpu.vector_store %arg4[%c0_7, %c0_8], %9 {strides = array<i32>} : memref<512x128xf32, #tpu.memory_space<vmem>>, vector<512x128xf32>,
    return
  }
  func.func @transform_0(%arg0: i32) -> (i32, i32) {
    %c0_i32 = arith.constant 0 : i32
    %c0_i32_0 = arith.constant 0 : i32
    return %arg0, %c0_i32 : i32, i32
  }
  func.func @transform_1(%arg0: i32) -> (i32, i32) {
    %c0_i32 = arith.constant 0 : i32
    %c0_i32_0 = arith.constant 0 : i32
    %c0_i32_1 = arith.constant 0 : i32
    return %c0_i32, %c0_i32_0 : i32, i32
  }
  func.func @transform_2(%arg0: i32) -> (i32, i32) {
    %c0_i32 = arith.constant 0 : i32
    %c0_i32_0 = arith.constant 0 : i32
    %c0_i32_1 = arith.constant 0 : i32
    return %c0_i32, %c0_i32_0 : i32, i32
  }
  func.func @transform_3(%arg0: i32) -> (i32, i32) {
    %c0_i32 = arith.constant 0 : i32
    %c0_i32_0 = arith.constant 0 : i32
    return %arg0, %c0_i32 : i32, i32
  }
}

</mosaic_0001>

<llo_original>
// kernel: tpu_custom_call.1
$region0: #{tpu_custom_call.1}
  #allocation0 [shape = 'u32[]', space=smem, size = 0x4, offset = 0x4, fixed_abs, tag = 'smem constant byte address 0x4 - core index']
  #allocation1 [shape = 'u32[144,128]{1,0:T(1,128)}', space=vmem, size = 0x12000, scoped, tag = 'internal scratch']
  %s0 = inlined_call_operand.vmem [shape: bf16[512,36], index: 0, kind: input, shape index: {}]
  %s1 = inlined_call_operand.vmem [shape: bf16[36,128], index: 1, kind: input, shape index: {}]
  %s2 = inlined_call_operand.vmem [shape: f32[1,128], index: 2, kind: input, shape index: {}]
  %s3 = inlined_call_operand.hbm [shape: f32[512,128], index: 3, kind: output, shape index: {}]
  %s4 = sld [smem:[#allocation0]]
  $region22: #{tpu_custom_call.1} parent=0
    _
  %s6 = ssub.s32 1, %s4
  %s7 = scalar_select 0, %s6, %s4
  $region1: #{tpu_custom_call.1} parent=0
    #allocation2 [shape = 'u8[262144]{0}', space=vmem, size = 0x40000, scoped, tag = 'output window, operand 0, single buffered']
    #allocation3 [shape = 's32[1]{0}', space=sflag, size = 0x4, scoped, tag = 'scoped memory for tpu_custom_call.1']
    %8 = vsyncpa [#allocation3], 0
    // Predicated region
    $region2: #{tpu_custom_call.1} parent=1 // pred_check
      _
    $region3: #{tpu_custom_call.1} parent=1 // pred_check_branch
      %10 = sbr.rel (0) target = $region5
    $region4: #{tpu_custom_call.1} parent=1 // pred_region
      _
    $region5: #{tpu_custom_call.1} parent=1 // pred_fallthru
      _
    // Predicated region
    $region6: #{tpu_custom_call.1} parent=1 // pred_check
      _
    $region7: #{tpu_custom_call.1} parent=1 // pred_check_branch
      %12 = sbr.rel (0) target = $region9
    $region8: #{tpu_custom_call.1} parent=1 // pred_region
      _
    $region9: #{tpu_custom_call.1} parent=1 // pred_fallthru
      _
    // Predicated region
    $region10: #{tpu_custom_call.1} parent=1 // pred_check
      _
    $region11: #{tpu_custom_call.1} parent=1 // pred_check_branch
      %14 = sbr.rel (0) target = $region13
    $region12: #{tpu_custom_call.1} parent=1 // pred_region
      _
    $region13: #{tpu_custom_call.1} parent=1 // pred_fallthru
      _
    %v16 = vld [vmem:[%s0] sm:$0xf]
    %v17 = vld [vmem:[%s0 + $0x4] sm:$0xf]
    %v18 = vld [vmem:[%s0 + $0x8] sm:$0xf]
    %v19 = vld [vmem:[%s0 + $0xc] sm:$0xf]
    %v20 = vld [vmem:[%s0 + $0x10] sm:$0xf]
    %v21 = vld [vmem:[%s0 + $0x14] sm:$0xf]
    %v22 = vld [vmem:[%s0 + $0x18] sm:$0xf]
    %v23 = vld [vmem:[%s0 + $0x1c] sm:$0xf]
    %v24 = vld [vmem:[%s0 + $0x20] sm:$0xf]
    %v25 = vld [vmem:[%s0 + $0x24] sm:$0xf]
    %v26 = vld [vmem:[%s0 + $0x28] sm:$0xf]
    %v27 = vld [vmem:[%s0 + $0x2c] sm:$0xf]
    %v28 = vld [vmem:[%s0 + $0x30] sm:$0xf]
    %v29 = vld [vmem:[%s0 + $0x34] sm:$0xf]
    %v30 = vld [vmem:[%s0 + $0x38] sm:$0xf]
    %v31 = vld [vmem:[%s0 + $0x3c] sm:$0xf]
    %v32 = vld [vmem:[%s0 + $0x40] sm:$0xf]
    %v33 = vld [vmem:[%s0 + $0x44] sm:$0xf]
    %v34 = vld [vmem:[%s0 + $0x48] sm:$0xf]
    %v35 = vld [vmem:[%s0 + $0x4c] sm:$0xf]
    %v36 = vld [vmem:[%s0 + $0x50] sm:$0xf]
    %v37 = vld [vmem:[%s0 + $0x54] sm:$0xf]
    %v38 = vld [vmem:[%s0 + $0x58] sm:$0xf]
    %v39 = vld [vmem:[%s0 + $0x5c] sm:$0xf]
    %v40 = vld [vmem:[%s0 + $0x60] sm:$0xf]
    %v41 = vld [vmem:[%s0 + $0x64] sm:$0xf]
    %v42 = vld [vmem:[%s0 + $0x68] sm:$0xf]
    %v43 = vld [vmem:[%s0 + $0x6c] sm:$0xf]
    %v44 = vld [vmem:[%s0 + $0x70] sm:$0xf]
    %v45 = vld [vmem:[%s0 + $0x74] sm:$0xf]
    %v46 = vld [vmem:[%s0 + $0x78] sm:$0xf]
    %v47 = vld [vmem:[%s0 + $0x7c] sm:$0xf]
    %v48 = vld [vmem:[%s0 + $0x80] sm:$0xf]
    %v49 = vld [vmem:[%s0 + $0x84] sm:$0xf]
    %v50 = vld [vmem:[%s0 + $0x88] sm:$0xf]
    %v51 = vld [vmem:[%s0 + $0x8c] sm:$0xf]
    %v52 = vld [vmem:[%s0 + $0x90] sm:$0xf]
    %v53 = vld [vmem:[%s0 + $0x94] sm:$0xf]
    %v54 = vld [vmem:[%s0 + $0x98] sm:$0xf]
    %v55 = vld [vmem:[%s0 + $0x9c] sm:$0xf]
    %v56 = vld [vmem:[%s0 + $0xa0] sm:$0xf]
    %v57 = vld [vmem:[%s0 + $0xa4] sm:$0xf]
    %v58 = vld [vmem:[%s0 + $0xa8] sm:$0xf]
    %v59 = vld [vmem:[%s0 + $0xac] sm:$0xf]
    %v60 = vld [vmem:[%s0 + $0xb0] sm:$0xf]
    %v61 = vld [vmem:[%s0 + $0xb4] sm:$0xf]
    %v62 = vld [vmem:[%s0 + $0xb8] sm:$0xf]
    %v63 = vld [vmem:[%s0 + $0xbc] sm:$0xf]
    %v64 = vld [vmem:[%s0 + $0xc0] sm:$0xf]
    %v65 = vld [vmem:[%s0 + $0xc4] sm:$0xf]
    %v66 = vld [vmem:[%s0 + $0xc8] sm:$0xf]
    %v67 = vld [vmem:[%s0 + $0xcc] sm:$0xf]
    %v68 = vld [vmem:[%s0 + $0xd0] sm:$0xf]
    %v69 = vld [vmem:[%s0 + $0xd4] sm:$0xf]
    %v70 = vld [vmem:[%s0 + $0xd8] sm:$0xf]
    %v71 = vld [vmem:[%s0 + $0xdc] sm:$0xf]
    %v72 = vld [vmem:[%s0 + $0xe0] sm:$0xf]
    %v73 = vld [vmem:[%s0 + $0xe4] sm:$0xf]
    %v74 = vld [vmem:[%s0 + $0xe8] sm:$0xf]
    %v75 = vld [vmem:[%s0 + $0xec] sm:$0xf]
    %v76 = vld [vmem:[%s0 + $0xf0] sm:$0xf]
    %v77 = vld [vmem:[%s0 + $0xf4] sm:$0xf]
    %v78 = vld [vmem:[%s0 + $0xf8] sm:$0xf]
    %v79 = vld [vmem:[%s0 + $0xfc] sm:$0xf]
    %v80 = vld [vmem:[%s1] sm:$0xf]
    %v81 = vld [vmem:[%s1 + $0x4] sm:$0xf]
    %v82 = vld [vmem:[%s1 + $0x8] sm:$0xf]
    %v83 = vld [vmem:[%s1 + $0xc] sm:$0xf]
    %v84 = vld [vmem:[%s1 + $0x10] sm:$0x3]
    %v85 = vld [vmem:[%s2] sm:$0x1]
    %v87 = vlaneseq
    %v88 = vshrl.u32 %v87, 7
    %v89 = vsub.s32 0, %v88
    %v90 = vrot.slane %v85, %v89
    %v156 = vunpack.c.l.b16 %v16
    %v157 = vunpack.c.l.b16 %v17
    %v158 = vunpack.c.l.b16 %v18
    %v159 = vunpack.c.l.b16 %v19
    %v160 = vunpack.c.l.b16 %v20
    %v161 = vunpack.c.l.b16 %v21
    %v162 = vunpack.c.l.b16 %v22
    %v163 = vunpack.c.l.b16 %v23
    %v164 = vunpack.c.l.b16 %v24
    %v165 = vunpack.c.l.b16 %v25
    %v166 = vunpack.c.l.b16 %v26
    %v167 = vunpack.c.l.b16 %v27
    %v168 = vunpack.c.l.b16 %v28
    %v169 = vunpack.c.l.b16 %v29
    %v170 = vunpack.c.l.b16 %v30
    %v171 = vunpack.c.l.b16 %v31
    %v172 = vunpack.c.l.b16 %v32
    %v173 = vunpack.c.l.b16 %v33
    %v174 = vunpack.c.l.b16 %v34
    %v175 = vunpack.c.l.b16 %v35
    %v176 = vunpack.c.l.b16 %v36
    %v177 = vunpack.c.l.b16 %v37
    %v178 = vunpack.c.l.b16 %v38
    %v179 = vunpack.c.l.b16 %v39
    %v180 = vunpack.c.l.b16 %v40
    %v181 = vunpack.c.l.b16 %v41
    %v182 = vunpack.c.l.b16 %v42
    %v183 = vunpack.c.l.b16 %v43
    %v184 = vunpack.c.l.b16 %v44
    %v185 = vunpack.c.l.b16 %v45
    %v186 = vunpack.c.l.b16 %v46
    %v187 = vunpack.c.l.b16 %v47
    %v188 = vunpack.c.l.b16 %v48
    %v189 = vunpack.c.l.b16 %v49
    %v190 = vunpack.c.l.b16 %v50
    %v191 = vunpack.c.l.b16 %v51
    %v192 = vunpack.c.l.b16 %v52
    %v193 = vunpack.c.l.b16 %v53
    %v194 = vunpack.c.l.b16 %v54
    %v195 = vunpack.c.l.b16 %v55
    %v196 = vunpack.c.l.b16 %v56
    %v197 = vunpack.c.l.b16 %v57
    %v198 = vunpack.c.l.b16 %v58
    %v199 = vunpack.c.l.b16 %v59
    %v200 = vunpack.c.l.b16 %v60
    %v201 = vunpack.c.l.b16 %v61
    %v202 = vunpack.c.l.b16 %v62
    %v203 = vunpack.c.l.b16 %v63
    %v204 = vunpack.c.l.b16 %v64
    %v205 = vunpack.c.l.b16 %v65
    %v206 = vunpack.c.l.b16 %v66
    %v207 = vunpack.c.l.b16 %v67
    %v208 = vunpack.c.l.b16 %v68
    %v209 = vunpack.c.l.b16 %v69
    %v210 = vunpack.c.l.b16 %v70
    %v211 = vunpack.c.l.b16 %v71
    %v212 = vunpack.c.l.b16 %v72
    %v213 = vunpack.c.l.b16 %v73
    %v214 = vunpack.c.l.b16 %v74
    %v215 = vunpack.c.l.b16 %v75
    %v216 = vunpack.c.l.b16 %v76
    %v217 = vunpack.c.l.b16 %v77
    %v218 = vunpack.c.l.b16 %v78
    %v219 = vunpack.c.l.b16 %v79
    %v220 = vpack.c.b16 %v157, %v156
    %v221 = vpack.c.b16 %v159, %v158
    %v222 = vpack.c.b16 %v161, %v160
    %v223 = vpack.c.b16 %v163, %v162
    %v224 = vpack.c.b16 %v165, %v164
    %v225 = vpack.c.b16 %v167, %v166
    %v226 = vpack.c.b16 %v169, %v168
    %v227 = vpack.c.b16 %v171, %v170
    %v228 = vpack.c.b16 %v173, %v172
    %v229 = vpack.c.b16 %v175, %v174
    %v230 = vpack.c.b16 %v177, %v176
    %v231 = vpack.c.b16 %v179, %v178
    %v232 = vpack.c.b16 %v181, %v180
    %v233 = vpack.c.b16 %v183, %v182
    %v234 = vpack.c.b16 %v185, %v184
    %v235 = vpack.c.b16 %v187, %v186
    %v236 = vpack.c.b16 %v189, %v188
    %v237 = vpack.c.b16 %v191, %v190
    %v238 = vpack.c.b16 %v193, %v192
    %v239 = vpack.c.b16 %v195, %v194
    %v240 = vpack.c.b16 %v197, %v196
    %v241 = vpack.c.b16 %v199, %v198
    %v242 = vpack.c.b16 %v201, %v200
    %v243 = vpack.c.b16 %v203, %v202
    %v244 = vpack.c.b16 %v205, %v204
    %v245 = vpack.c.b16 %v207, %v206
    %v246 = vpack.c.b16 %v209, %v208
    %v247 = vpack.c.b16 %v211, %v210
    %v248 = vpack.c.b16 %v213, %v212
    %v249 = vpack.c.b16 %v215, %v214
    %v250 = vpack.c.b16 %v217, %v216
    %v251 = vpack.c.b16 %v219, %v218
    %v257 = vunpack.c.l.b16 %v80
    %v258 = vunpack.c.l.b16 %v81
    %v259 = vunpack.c.l.b16 %v82
    %v260 = vunpack.c.l.b16 %v83
    %v261 = vunpack.c.l.b16 %v84
    %v262 = vpack.c.b16 %v258, %v257
    %v263 = vpack.c.b16 %v260, %v259
    %v264 = vpack.c.b16 %v261, %v261
    %vm267 = vcmask 293888
    %v269 = vsel %vm267, %v220, 0
    %v272 = vsel %vm267, %v221, 0
    %v275 = vsel %vm267, %v222, 0
    %v278 = vsel %vm267, %v223, 0
    %v281 = vsel %vm267, %v224, 0
    %v284 = vsel %vm267, %v225, 0
    %v287 = vsel %vm267, %v226, 0
    %v290 = vsel %vm267, %v227, 0
    %v293 = vsel %vm267, %v228, 0
    %v296 = vsel %vm267, %v229, 0
    %v299 = vsel %vm267, %v230, 0
    %v302 = vsel %vm267, %v231, 0
    %v305 = vsel %vm267, %v232, 0
    %v308 = vsel %vm267, %v233, 0
    %v311 = vsel %vm267, %v234, 0
    %v314 = vsel %vm267, %v235, 0
    %v317 = vsel %vm267, %v236, 0
    %v320 = vsel %vm267, %v237, 0
    %v323 = vsel %vm267, %v238, 0
    %v326 = vsel %vm267, %v239, 0
    %v329 = vsel %vm267, %v240, 0
    %v332 = vsel %vm267, %v241, 0
    %v335 = vsel %vm267, %v242, 0
    %v338 = vsel %vm267, %v243, 0
    %v341 = vsel %vm267, %v244, 0
    %v344 = vsel %vm267, %v245, 0
    %v347 = vsel %vm267, %v246, 0
    %v350 = vsel %vm267, %v247, 0
    %v353 = vsel %vm267, %v248, 0
    %v356 = vsel %vm267, %v249, 0
    %v359 = vsel %vm267, %v250, 0
    %v362 = vsel %vm267, %v251, 0
    %vm364 = vcmask 1041408
    %v366 = vsel %vm364, %v264, 0
    %368 = vmatprep.subr.bf16.mxu0 0
    %369 = vmatpush1.bf16.msra.mxu0 %v262
    %370 = vmatprep.subr.bf16.mxu0 0
    %371 = vmatpush1.bf16.msra.mxu0 %v263
    %372 = vmatprep.subr.bf16.mxu0 0
    %373 = vmatpush1.bf16.msra.mxu0 %v366
    %374 = vmatprep.subr.bf16.mxu0 0
    %375 = vmatpush1.bf16.msra.mxu0 0
    %376 = vmatprep.subr.bf16.mxu0 0
    %377 = vmatpush1.bf16.msra.mxu0 0
    %378 = vmatprep.subr.bf16.mxu0 0
    %379 = vmatpush1.bf16.msra.mxu0 0
    %380 = vmatprep.subr.bf16.mxu0 0
    %381 = vmatpush1.bf16.msra.mxu0 0
    %382 = vmatprep.subr.bf16.mxu0 0
    %383 = vmatpush1.bf16.msra.mxu0 0
    %384 = vmatprep.subr.bf16.mxu0 0
    %385 = vmatpush1.bf16.msra.mxu0 0
    %386 = vmatprep.subr.bf16.mxu0 0
    %387 = vmatpush1.bf16.msra.mxu0 0
    %388 = vmatprep.subr.bf16.mxu0 0
    %389 = vmatpush1.bf16.msra.mxu0 0
    %390 = vmatprep.subr.bf16.mxu0 0
    %391 = vmatpush1.bf16.msra.mxu0 0
    %392 = vmatprep.subr.bf16.mxu0 0
    %393 = vmatpush1.bf16.msra.mxu0 0
    %394 = vmatprep.subr.bf16.mxu0 0
    %395 = vmatpush1.bf16.msra.mxu0 0
    %396 = vmatprep.subr.bf16.mxu0 0
    %397 = vmatpush1.bf16.msra.mxu0 0
    %398 = vmatprep.subr.bf16.mxu0 0
    %399 = vmatpush1.bf16.msra.mxu0 0
    %400 = vmatprep.mubr.bf16.mxu0 0
    %401 = vmatmul.mubr.bf16.gmra.mrb[0].mxu0 %v269
    %v402 = vpop.f32.mrb[0].mxu0
    %v403 = vadd.f32 %v90, %v402
    %v404 = vpop.f32.mrb[0].mxu0
    %v405 = vpop.f32.mrb[0].mxu0
    %v406 = vadd.f32 %v90, %v405
    %v407 = vpop.f32.mrb[0].mxu0
    %408 = vmatprep.mubr.bf16.mxu0 0
    %409 = vmatmul.mubr.bf16.gmra.mrb[0].mxu0 %v272
    %v410 = vpop.f32.mrb[0].mxu0
    %v411 = vadd.f32 %v90, %v410
    %v412 = vpop.f32.mrb[0].mxu0
    %v413 = vpop.f32.mrb[0].mxu0
    %v414 = vadd.f32 %v90, %v413
    %v415 = vpop.f32.mrb[0].mxu0
    %416 = vmatprep.mubr.bf16.mxu0 0
    %417 = vmatmul.mubr.bf16.gmra.mrb[0].mxu0 %v275
    %v418 = vpop.f32.mrb[0].mxu0
    %v419 = vadd.f32 %v90, %v418
    %v420 = vpop.f32.mrb[0].mxu0
    %v421 = vpop.f32.mrb[0].mxu0
    %v422 = vadd.f32 %v90, %v421
    %v423 = vpop.f32.mrb[0].mxu0
    %424 = vmatprep.mubr.bf16.mxu0 0
    %425 = vmatmul.mubr.bf16.gmra.mrb[0].mxu0 %v278
    %v426 = vpop.f32.mrb[0].mxu0
    %v427 = vadd.f32 %v90, %v426
    %v428 = vpop.f32.mrb[0].mxu0
    %v429 = vpop.f32.mrb[0].mxu0
    %v430 = vadd.f32 %v90, %v429
    %v431 = vpop.f32.mrb[0].mxu0
    %432 = vmatprep.mubr.bf16.mxu0 0
    %433 = vmatmul.mubr.bf16.gmra.mrb[0].mxu0 %v281
    %v434 = vpop.f32.mrb[0].mxu0
    %v435 = vadd.f32 %v90, %v434
    %v436 = vpop.f32.mrb[0].mxu0
    %v437 = vpop.f32.mrb[0].mxu0
    %v438 = vadd.f32 %v90, %v437
    %v439 = vpop.f32.mrb[0].mxu0
    %440 = vmatprep.mubr.bf16.mxu0 0
    %441 = vmatmul.mubr.bf16.gmra.mrb[0].mxu0 %v284
    %v442 = vpop.f32.mrb[0].mxu0
    %v443 = vadd.f32 %v90, %v442
    %v444 = vpop.f32.mrb[0].mxu0
    %v445 = vpop.f32.mrb[0].mxu0
    %v446 = vadd.f32 %v90, %v445
    %v447 = vpop.f32.mrb[0].mxu0
    %448 = vmatprep.mubr.bf16.mxu0 0
    %449 = vmatmul.mubr.bf16.gmra.mrb[0].mxu0 %v287
    %v450 = vpop.f32.mrb[0].mxu0
    %v451 = vadd.f32 %v90, %v450
    %v452 = vpop.f32.mrb[0].mxu0
    %v453 = vpop.f32.mrb[0].mxu0
    %v454 = vadd.f32 %v90, %v453
    %v455 = vpop.f32.mrb[0].mxu0
    %456 = vmatprep.mubr.bf16.mxu0 0
    %457 = vmatmul.mubr.bf16.gmra.mrb[0].mxu0 %v290
    %v458 = vpop.f32.mrb[0].mxu0
    %v459 = vadd.f32 %v90, %v458
    %v460 = vpop.f32.mrb[0].mxu0
    %v461 = vpop.f32.mrb[0].mxu0
    %v462 = vadd.f32 %v90, %v461
    %v463 = vpop.f32.mrb[0].mxu0
    %464 = vmatprep.mubr.bf16.mxu0 0
    %465 = vmatmul.mubr.bf16.gmra.mrb[0].mxu0 %v293
    %v466 = vpop.f32.mrb[0].mxu0
    %v467 = vadd.f32 %v90, %v466
    %v468 = vpop.f32.mrb[0].mxu0
    %v469 = vpop.f32.mrb[0].mxu0
    %v470 = vadd.f32 %v90, %v469
    %v471 = vpop.f32.mrb[0].mxu0
    %472 = vmatprep.mubr.bf16.mxu0 0
    %473 = vmatmul.mubr.bf16.gmra.mrb[0].mxu0 %v296
    %v474 = vpop.f32.mrb[0].mxu0
    %v475 = vadd.f32 %v90, %v474
    %v476 = vpop.f32.mrb[0].mxu0
    %v477 = vpop.f32.mrb[0].mxu0
    %v478 = vadd.f32 %v90, %v477
    %v479 = vpop.f32.mrb[0].mxu0
    %480 = vmatprep.mubr.bf16.mxu0 0
    %481 = vmatmul.mubr.bf16.gmra.mrb[0].mxu0 %v299
    %v482 = vpop.f32.mrb[0].mxu0
    %v483 = vadd.f32 %v90, %v482
    %v484 = vpop.f32.mrb[0].mxu0
    %v485 = vpop.f32.mrb[0].mxu0
    %v486 = vadd.f32 %v90, %v485
    %v487 = vpop.f32.mrb[0].mxu0
    %488 = vmatprep.mubr.bf16.mxu0 0
    %489 = vmatmul.mubr.bf16.gmra.mrb[0].mxu0 %v302
    %v490 = vpop.f32.mrb[0].mxu0
    %v491 = vadd.f32 %v90, %v490
    %v492 = vpop.f32.mrb[0].mxu0
    %v493 = vpop.f32.mrb[0].mxu0
    %v494 = vadd.f32 %v90, %v493
    %v495 = vpop.f32.mrb[0].mxu0
    %496 = vmatprep.mubr.bf16.mxu0 0
    %497 = vmatmul.mubr.bf16.gmra.mrb[0].mxu0 %v305
    %v498 = vpop.f32.mrb[0].mxu0
    %v499 = vadd.f32 %v90, %v498
    %v500 = vpop.f32.mrb[0].mxu0
    %v501 = vpop.f32.mrb[0].mxu0
    %v502 = vadd.f32 %v90, %v501
    %v503 = vpop.f32.mrb[0].mxu0
    %504 = vmatprep.mubr.bf16.mxu0 0
    %505 = vmatmul.mubr.bf16.gmra.mrb[0].mxu0 %v308
    %v506 = vpop.f32.mrb[0].mxu0
    %v507 = vadd.f32 %v90, %v506
    %v508 = vpop.f32.mrb[0].mxu0
    %v509 = vpop.f32.mrb[0].mxu0
    %v510 = vadd.f32 %v90, %v509
    %v511 = vpop.f32.mrb[0].mxu0
    %512 = vmatprep.mubr.bf16.mxu0 0
    %513 = vmatmul.mubr.bf16.gmra.mrb[0].mxu0 %v311
    %v514 = vpop.f32.mrb[0].mxu0
    %v515 = vadd.f32 %v90, %v514
    %v516 = vpop.f32.mrb[0].mxu0
    %v517 = vpop.f32.mrb[0].mxu0
    %v518 = vadd.f32 %v90, %v517
    %v519 = vpop.f32.mrb[0].mxu0
    %520 = vmatprep.mubr.bf16.mxu0 0
    %521 = vmatmul.mubr.bf16.gmra.mrb[0].mxu0 %v314
    %v522 = vpop.f32.mrb[0].mxu0
    %v523 = vadd.f32 %v90, %v522
    %v524 = vpop.f32.mrb[0].mxu0
    %v525 = vpop.f32.mrb[0].mxu0
    %v526 = vadd.f32 %v90, %v525
    %v527 = vpop.f32.mrb[0].mxu0
    %528 = vmatprep.mubr.bf16.mxu0 0
    %529 = vmatmul.mubr.bf16.gmra.mrb[0].mxu0 %v317
    %v530 = vpop.f32.mrb[0].mxu0
    %v531 = vadd.f32 %v90, %v530
    %v532 = vpop.f32.mrb[0].mxu0
    %v533 = vpop.f32.mrb[0].mxu0
    %v534 = vadd.f32 %v90, %v533
    %v535 = vpop.f32.mrb[0].mxu0
    %536 = vmatprep.mubr.bf16.mxu0 0
    %537 = vmatmul.mubr.bf16.gmra.mrb[0].mxu0 %v320
    %v538 = vpop.f32.mrb[0].mxu0
    %v539 = vadd.f32 %v90, %v538
    %v540 = vpop.f32.mrb[0].mxu0
    %v541 = vpop.f32.mrb[0].mxu0
    %v542 = vadd.f32 %v90, %v541
    %v543 = vpop.f32.mrb[0].mxu0
    %544 = vmatprep.mubr.bf16.mxu0 0
    %545 = vmatmul.mubr.bf16.gmra.mrb[0].mxu0 %v323
    %v546 = vpop.f32.mrb[0].mxu0
    %v547 = vadd.f32 %v90, %v546
    %v548 = vpop.f32.mrb[0].mxu0
    %v549 = vpop.f32.mrb[0].mxu0
    %v550 = vadd.f32 %v90, %v549
    %v551 = vpop.f32.mrb[0].mxu0
    %552 = vmatprep.mubr.bf16.mxu0 0
    %553 = vmatmul.mubr.bf16.gmra.mrb[0].mxu0 %v326
    %v554 = vpop.f32.mrb[0].mxu0
    %v555 = vadd.f32 %v90, %v554
    %v556 = vpop.f32.mrb[0].mxu0
    %v557 = vpop.f32.mrb[0].mxu0
    %v558 = vadd.f32 %v90, %v557
    %v559 = vpop.f32.mrb[0].mxu0
    %560 = vmatprep.mubr.bf16.mxu0 0
    %561 = vmatmul.mubr.bf16.gmra.mrb[0].mxu0 %v329
    %v562 = vpop.f32.mrb[0].mxu0
    %v563 = vadd.f32 %v90, %v562
    %v564 = vpop.f32.mrb[0].mxu0
    %v565 = vpop.f32.mrb[0].mxu0
    %v566 = vadd.f32 %v90, %v565
    %v567 = vpop.f32.mrb[0].mxu0
    %568 = vmatprep.mubr.bf16.mxu0 0
    %569 = vmatmul.mubr.bf16.gmra.mrb[0].mxu0 %v332
    %v570 = vpop.f32.mrb[0].mxu0
    %v571 = vadd.f32 %v90, %v570
    %v572 = vpop.f32.mrb[0].mxu0
    %v573 = vpop.f32.mrb[0].mxu0
    %v574 = vadd.f32 %v90, %v573
    %v575 = vpop.f32.mrb[0].mxu0
    %576 = vmatprep.mubr.bf16.mxu0 0
    %577 = vmatmul.mubr.bf16.gmra.mrb[0].mxu0 %v335
    %v578 = vpop.f32.mrb[0].mxu0
    %v579 = vadd.f32 %v90, %v578
    %v580 = vpop.f32.mrb[0].mxu0
    %v581 = vpop.f32.mrb[0].mxu0
    %v582 = vadd.f32 %v90, %v581
    %v583 = vpop.f32.mrb[0].mxu0
    %584 = vmatprep.mubr.bf16.mxu0 0
    %585 = vmatmul.mubr.bf16.gmra.mrb[0].mxu0 %v338
    %v586 = vpop.f32.mrb[0].mxu0
    %v587 = vadd.f32 %v90, %v586
    %v588 = vpop.f32.mrb[0].mxu0
    %v589 = vpop.f32.mrb[0].mxu0
    %v590 = vadd.f32 %v90, %v589
    %v591 = vpop.f32.mrb[0].mxu0
    %592 = vmatprep.mubr.bf16.mxu0 0
    %593 = vmatmul.mubr.bf16.gmra.mrb[0].mxu0 %v341
    %v594 = vpop.f32.mrb[0].mxu0
    %v595 = vadd.f32 %v90, %v594
    %v596 = vpop.f32.mrb[0].mxu0
    %v597 = vpop.f32.mrb[0].mxu0
    %v598 = vadd.f32 %v90, %v597
    %v599 = vpop.f32.mrb[0].mxu0
    %600 = vmatprep.mubr.bf16.mxu0 0
    %601 = vmatmul.mubr.bf16.gmra.mrb[0].mxu0 %v344
    %v602 = vpop.f32.mrb[0].mxu0
    %v603 = vadd.f32 %v90, %v602
    %v604 = vpop.f32.mrb[0].mxu0
    %v605 = vpop.f32.mrb[0].mxu0
    %v606 = vadd.f32 %v90, %v605
    %v607 = vpop.f32.mrb[0].mxu0
    %608 = vmatprep.mubr.bf16.mxu0 0
    %609 = vmatmul.mubr.bf16.gmra.mrb[0].mxu0 %v347
    %v610 = vpop.f32.mrb[0].mxu0
    %v611 = vadd.f32 %v90, %v610
    %v612 = vpop.f32.mrb[0].mxu0
    %v613 = vpop.f32.mrb[0].mxu0
    %v614 = vadd.f32 %v90, %v613
    %v615 = vpop.f32.mrb[0].mxu0
    %616 = vmatprep.mubr.bf16.mxu0 0
    %617 = vmatmul.mubr.bf16.gmra.mrb[0].mxu0 %v350
    %v618 = vpop.f32.mrb[0].mxu0
    %v619 = vadd.f32 %v90, %v618
    %v620 = vpop.f32.mrb[0].mxu0
    %v621 = vpop.f32.mrb[0].mxu0
    %v622 = vadd.f32 %v90, %v621
    %v623 = vpop.f32.mrb[0].mxu0
    %624 = vmatprep.mubr.bf16.mxu0 0
    %625 = vmatmul.mubr.bf16.gmra.mrb[0].mxu0 %v353
    %v626 = vpop.f32.mrb[0].mxu0
    %v627 = vadd.f32 %v90, %v626
    %v628 = vpop.f32.mrb[0].mxu0
    %v629 = vpop.f32.mrb[0].mxu0
    %v630 = vadd.f32 %v90, %v629
    %v631 = vpop.f32.mrb[0].mxu0
    %632 = vmatprep.mubr.bf16.mxu0 0
    %633 = vmatmul.mubr.bf16.gmra.mrb[0].mxu0 %v356
    %v634 = vpop.f32.mrb[0].mxu0
    %v635 = vadd.f32 %v90, %v634
    %v636 = vpop.f32.mrb[0].mxu0
    %v637 = vpop.f32.mrb[0].mxu0
    %v638 = vadd.f32 %v90, %v637
    %v639 = vpop.f32.mrb[0].mxu0
    %640 = vmatprep.mubr.bf16.mxu0 0
    %641 = vmatmul.mubr.bf16.gmra.mrb[0].mxu0 %v359
    %v642 = vpop.f32.mrb[0].mxu0
    %v643 = vadd.f32 %v90, %v642
    %v644 = vpop.f32.mrb[0].mxu0
    %v645 = vpop.f32.mrb[0].mxu0
    %v646 = vadd.f32 %v90, %v645
    %v647 = vpop.f32.mrb[0].mxu0
    %648 = vmatprep.mubr.bf16.mxu0 0
    %649 = vmatmul.mubr.bf16.gmra.mrb[0].mxu0 %v362
    %v650 = vpop.f32.mrb[0].mxu0
    %v651 = vadd.f32 %v90, %v650
    %v652 = vpop.f32.mrb[0].mxu0
    %v653 = vpop.f32.mrb[0].mxu0
    %v654 = vadd.f32 %v90, %v653
    %v655 = vpop.f32.mrb[0].mxu0
    %656 = vdwg.mxu0
    %v657 = vmax.f32 %v403, 0.0
    %v658 = vmax.f32 %v406, 0.0
    %v659 = vmax.f32 %v411, 0.0
    %v660 = vmax.f32 %v414, 0.0
    %v661 = vmax.f32 %v419, 0.0
    %v662 = vmax.f32 %v422, 0.0
    %v663 = vmax.f32 %v427, 0.0
    %v664 = vmax.f32 %v430, 0.0
    %v665 = vmax.f32 %v435, 0.0
    %v666 = vmax.f32 %v438, 0.0
    %v667 = vmax.f32 %v443, 0.0
    %v668 = vmax.f32 %v446, 0.0
    %v669 = vmax.f32 %v451, 0.0
    %v670 = vmax.f32 %v454, 0.0
    %v671 = vmax.f32 %v459, 0.0
    %v672 = vmax.f32 %v462, 0.0
    %v673 = vmax.f32 %v467, 0.0
    %v674 = vmax.f32 %v470, 0.0
    %v675 = vmax.f32 %v475, 0.0
    %v676 = vmax.f32 %v478, 0.0
    %v677 = vmax.f32 %v483, 0.0
    %v678 = vmax.f32 %v486, 0.0
    %v679 = vmax.f32 %v491, 0.0
    %v680 = vmax.f32 %v494, 0.0
    %v681 = vmax.f32 %v499, 0.0
    %v682 = vmax.f32 %v502, 0.0
    %v683 = vmax.f32 %v507, 0.0
    %v684 = vmax.f32 %v510, 0.0
    %v685 = vmax.f32 %v515, 0.0
    %v686 = vmax.f32 %v518, 0.0
    %v687 = vmax.f32 %v523, 0.0
    %v688 = vmax.f32 %v526, 0.0
    %v689 = vmax.f32 %v531, 0.0
    %v690 = vmax.f32 %v534, 0.0
    %v691 = vmax.f32 %v539, 0.0
    %v692 = vmax.f32 %v542, 0.0
    %v693 = vmax.f32 %v547, 0.0
    %v694 = vmax.f32 %v550, 0.0
    %v695 = vmax.f32 %v555, 0.0
    %v696 = vmax.f32 %v558, 0.0
    %v697 = vmax.f32 %v563, 0.0
    %v698 = vmax.f32 %v566, 0.0
    %v699 = vmax.f32 %v571, 0.0
    %v700 = vmax.f32 %v574, 0.0
    %v701 = vmax.f32 %v579, 0.0
    %v702 = vmax.f32 %v582, 0.0
    %v703 = vmax.f32 %v587, 0.0
    %v704 = vmax.f32 %v590, 0.0
    %v705 = vmax.f32 %v595, 0.0
    %v706 = vmax.f32 %v598, 0.0
    %v707 = vmax.f32 %v603, 0.0
    %v708 = vmax.f32 %v606, 0.0
    %v709 = vmax.f32 %v611, 0.0
    %v710 = vmax.f32 %v614, 0.0
    %v711 = vmax.f32 %v619, 0.0
    %v712 = vmax.f32 %v622, 0.0
    %v713 = vmax.f32 %v627, 0.0
    %v714 = vmax.f32 %v630, 0.0
    %v715 = vmax.f32 %v635, 0.0
    %v716 = vmax.f32 %v638, 0.0
    %v717 = vmax.f32 %v643, 0.0
    %v718 = vmax.f32 %v646, 0.0
    %v719 = vmax.f32 %v651, 0.0
    %v720 = vmax.f32 %v654, 0.0
    %v721 = vmin.f32 %v657, 6.0
    %v722 = vmin.f32 %v658, 6.0
    %v723 = vmin.f32 %v659, 6.0
    %v724 = vmin.f32 %v660, 6.0
    %v725 = vmin.f32 %v661, 6.0
    %v726 = vmin.f32 %v662, 6.0
    %v727 = vmin.f32 %v663, 6.0
    %v728 = vmin.f32 %v664, 6.0
    %v729 = vmin.f32 %v665, 6.0
    %v730 = vmin.f32 %v666, 6.0
    %v731 = vmin.f32 %v667, 6.0
    %v732 = vmin.f32 %v668, 6.0
    %v733 = vmin.f32 %v669, 6.0
    %v734 = vmin.f32 %v670, 6.0
    %v735 = vmin.f32 %v671, 6.0
    %v736 = vmin.f32 %v672, 6.0
    %v737 = vmin.f32 %v673, 6.0
    %v738 = vmin.f32 %v674, 6.0
    %v739 = vmin.f32 %v675, 6.0
    %v740 = vmin.f32 %v676, 6.0
    %v741 = vmin.f32 %v677, 6.0
    %v742 = vmin.f32 %v678, 6.0
    %v743 = vmin.f32 %v679, 6.0
    %v744 = vmin.f32 %v680, 6.0
    %v745 = vmin.f32 %v681, 6.0
    %v746 = vmin.f32 %v682, 6.0
    %v747 = vmin.f32 %v683, 6.0
    %v748 = vmin.f32 %v684, 6.0
    %v749 = vmin.f32 %v685, 6.0
    %v750 = vmin.f32 %v686, 6.0
    %v751 = vmin.f32 %v687, 6.0
    %v752 = vmin.f32 %v688, 6.0
    %v753 = vmin.f32 %v689, 6.0
    %v754 = vmin.f32 %v690, 6.0
    %v755 = vmin.f32 %v691, 6.0
    %v756 = vmin.f32 %v692, 6.0
    %v757 = vmin.f32 %v693, 6.0
    %v758 = vmin.f32 %v694, 6.0
    %v759 = vmin.f32 %v695, 6.0
    %v760 = vmin.f32 %v696, 6.0
    %v761 = vmin.f32 %v697, 6.0
    %v762 = vmin.f32 %v698, 6.0
    %v763 = vmin.f32 %v699, 6.0
    %v764 = vmin.f32 %v700, 6.0
    %v765 = vmin.f32 %v701, 6.0
    %v766 = vmin.f32 %v702, 6.0
    %v767 = vmin.f32 %v703, 6.0
    %v768 = vmin.f32 %v704, 6.0
    %v769 = vmin.f32 %v705, 6.0
    %v770 = vmin.f32 %v706, 6.0
    %v771 = vmin.f32 %v707, 6.0
    %v772 = vmin.f32 %v708, 6.0
    %v773 = vmin.f32 %v709, 6.0
    %v774 = vmin.f32 %v710, 6.0
    %v775 = vmin.f32 %v711, 6.0
    %v776 = vmin.f32 %v712, 6.0
    %v777 = vmin.f32 %v713, 6.0
    %v778 = vmin.f32 %v714, 6.0
    %v779 = vmin.f32 %v715, 6.0
    %v780 = vmin.f32 %v716, 6.0
    %v781 = vmin.f32 %v717, 6.0
    %v782 = vmin.f32 %v718, 6.0
    %v783 = vmin.f32 %v719, 6.0
    %v784 = vmin.f32 %v720, 6.0
    %785 = vst [vmem:[#allocation2] sm:$0xff] %v721
    %786 = vst [vmem:[#allocation2 + $0x8] sm:$0xff] %v722
    %787 = vst [vmem:[#allocation2 + $0x10] sm:$0xff] %v723
    %788 = vst [vmem:[#allocation2 + $0x18] sm:$0xff] %v724
    %789 = vst [vmem:[#allocation2 + $0x20] sm:$0xff] %v725
    %790 = vst [vmem:[#allocation2 + $0x28] sm:$0xff] %v726
    %791 = vst [vmem:[#allocation2 + $0x30] sm:$0xff] %v727
    %792 = vst [vmem:[#allocation2 + $0x38] sm:$0xff] %v728
    %793 = vst [vmem:[#allocation2 + $0x40] sm:$0xff] %v729
    %794 = vst [vmem:[#allocation2 + $0x48] sm:$0xff] %v730
    %795 = vst [vmem:[#allocation2 + $0x50] sm:$0xff] %v731
    %796 = vst [vmem:[#allocation2 + $0x58] sm:$0xff] %v732
    %797 = vst [vmem:[#allocation2 + $0x60] sm:$0xff] %v733
    %798 = vst [vmem:[#allocation2 + $0x68] sm:$0xff] %v734
    %799 = vst [vmem:[#allocation2 + $0x70] sm:$0xff] %v735
    %800 = vst [vmem:[#allocation2 + $0x78] sm:$0xff] %v736
    %801 = vst [vmem:[#allocation2 + $0x80] sm:$0xff] %v737
    %802 = vst [vmem:[#allocation2 + $0x88] sm:$0xff] %v738
    %803 = vst [vmem:[#allocation2 + $0x90] sm:$0xff] %v739
    %804 = vst [vmem:[#allocation2 + $0x98] sm:$0xff] %v740
    %805 = vst [vmem:[#allocation2 + $0xa0] sm:$0xff] %v741
    %806 = vst [vmem:[#allocation2 + $0xa8] sm:$0xff] %v742
    %807 = vst [vmem:[#allocation2 + $0xb0] sm:$0xff] %v743
    %808 = vst [vmem:[#allocation2 + $0xb8] sm:$0xff] %v744
    %809 = vst [vmem:[#allocation2 + $0xc0] sm:$0xff] %v745
    %810 = vst [vmem:[#allocation2 + $0xc8] sm:$0xff] %v746
    %811 = vst [vmem:[#allocation2 + $0xd0] sm:$0xff] %v747
    %812 = vst [vmem:[#allocation2 + $0xd8] sm:$0xff] %v748
    %813 = vst [vmem:[#allocation2 + $0xe0] sm:$0xff] %v749
    %814 = vst [vmem:[#allocation2 + $0xe8] sm:$0xff] %v750
    %815 = vst [vmem:[#allocation2 + $0xf0] sm:$0xff] %v751
    %816 = vst [vmem:[#allocation2 + $0xf8] sm:$0xff] %v752
    %817 = vst [vmem:[#allocation2 + $0x100] sm:$0xff] %v753
    %818 = vst [vmem:[#allocation2 + $0x108] sm:$0xff] %v754
    %819 = vst [vmem:[#allocation2 + $0x110] sm:$0xff] %v755
    %820 = vst [vmem:[#allocation2 + $0x118] sm:$0xff] %v756
    %821 = vst [vmem:[#allocation2 + $0x120] sm:$0xff] %v757
    %822 = vst [vmem:[#allocation2 + $0x128] sm:$0xff] %v758
    %823 = vst [vmem:[#allocation2 + $0x130] sm:$0xff] %v759
    %824 = vst [vmem:[#allocation2 + $0x138] sm:$0xff] %v760
    %825 = vst [vmem:[#allocation2 + $0x140] sm:$0xff] %v761
    %826 = vst [vmem:[#allocation2 + $0x148] sm:$0xff] %v762
    %827 = vst [vmem:[#allocation2 + $0x150] sm:$0xff] %v763
    %828 = vst [vmem:[#allocation2 + $0x158] sm:$0xff] %v764
    %829 = vst [vmem:[#allocation2 + $0x160] sm:$0xff] %v765
    %830 = vst [vmem:[#allocation2 + $0x168] sm:$0xff] %v766
    %831 = vst [vmem:[#allocation2 + $0x170] sm:$0xff] %v767
    %832 = vst [vmem:[#allocation2 + $0x178] sm:$0xff] %v768
    %833 = vst [vmem:[#allocation2 + $0x180] sm:$0xff] %v769
    %834 = vst [vmem:[#allocation2 + $0x188] sm:$0xff] %v770
    %835 = vst [vmem:[#allocation2 + $0x190] sm:$0xff] %v771
    %836 = vst [vmem:[#allocation2 + $0x198] sm:$0xff] %v772
    %837 = vst [vmem:[#allocation2 + $0x1a0] sm:$0xff] %v773
    %838 = vst [vmem:[#allocation2 + $0x1a8] sm:$0xff] %v774
    %839 = vst [vmem:[#allocation2 + $0x1b0] sm:$0xff] %v775
    %840 = vst [vmem:[#allocation2 + $0x1b8] sm:$0xff] %v776
    %841 = vst [vmem:[#allocation2 + $0x1c0] sm:$0xff] %v777
    %842 = vst [vmem:[#allocation2 + $0x1c8] sm:$0xff] %v778
    %843 = vst [vmem:[#allocation2 + $0x1d0] sm:$0xff] %v779
    %844 = vst [vmem:[#allocation2 + $0x1d8] sm:$0xff] %v780
    %845 = vst [vmem:[#allocation2 + $0x1e0] sm:$0xff] %v781
    %846 = vst [vmem:[#allocation2 + $0x1e8] sm:$0xff] %v782
    %847 = vst [vmem:[#allocation2 + $0x1f0] sm:$0xff] %v783
    %848 = vst [vmem:[#allocation2 + $0x1f8] sm:$0xff] %v784
    // Predicated region
    $region14: #{tpu_custom_call.1} parent=1 // pred_check
      _
    $region15: #{tpu_custom_call.1} parent=1 // pred_check_branch
      %850 = sbr.rel (0) target = $region17
    $region16: #{tpu_custom_call.1} parent=1 // pred_region
      %s852 = ssub.s32 8192, 8192
      %853 = vsyncadd [#allocation3], %s852
      %s854 = sshll.u32 [#allocation2], 4
      %s855 = int_to_ptr.vmem [resolvable:$true] %s854
      %860 = dma.vmem_to_hbm [thread:$0]  %s855, 8192, %s3, [#allocation3], 128, 128, 8
    $region17: #{tpu_custom_call.1} parent=1 // pred_fallthru
      _
    // Predicated region
    $region18: #{tpu_custom_call.1} parent=1 // pred_check
      _
    $region19: #{tpu_custom_call.1} parent=1 // pred_check_branch
      %862 = sbr.rel (0) target = $region21
    $region20: #{tpu_custom_call.1} parent=1 // pred_region
      %863 = dma.done [#allocation3], 8192
    $region21: #{tpu_custom_call.1} parent=1 // pred_fallthru
      _
    %864 = vsyncpa [#allocation3], 1

</llo_original>
